<compile_context>
chip_gen: v7x
topology: tpu7x:2x2x1
jax: 0.10.0
libtpu: 0.0.40
codegen_flags: <defaults>
</compile_context>

<pallas_src>
import functools

import jax
import jax.numpy as jnp
from jax.experimental import pallas as pl
from jax.experimental.pallas import tpu as pltpu


# --------------------------------------------------------------------------
# Kernel
# --------------------------------------------------------------------------
def _actor_critic_kernel(state_ref, w1_ref, w2_ref, w3_ref, b_ref, out_ref,
                         *, out_dim):
    """Fused actor+critic forward for one batch tile.

    state_ref : [TB, D]        (bf16)
    w1_ref    : [D, 2H]        (bf16)   [actor_w1 | critic_w1]
    w2_ref    : [2H, 2H]       (bf16)   blkdiag(actor_w2, critic_w2)
    w3_ref    : [2H, 2*out+1]  (bf16)   blkdiag(actor_w3, critic_w3)
    b_ref     : [3, W]         (f32)    rows = packed biases of layers 1..3
    out_ref   : [TB, 2*out+1]  (f32)    columns = [mu | std | value]
    """
    h2 = w1_ref.shape[1]           # 2*hidden
    ow = w3_ref.shape[1]           # 2*out + 1
    cdt = w1_ref.dtype             # bf16 compute dtype for the MXU

    x = state_ref[...]
    b = b_ref[...]                 # [3, W] f32
    b1 = b[0:1, 0:h2]
    b2 = b[1:2, 0:h2]
    b3 = b[2:3, 0:ow]

    # layer 1: shared input, concatenated actor|critic hidden
    h = jnp.dot(x, w1_ref[...], preferred_element_type=jnp.float32) + b1
    h = jnp.maximum(h, 0.0)

    # layer 2: block-diagonal actor/critic
    h = jnp.dot(h.astype(cdt), w2_ref[...],
                preferred_element_type=jnp.float32) + b2
    h = jnp.maximum(h, 0.0)

    # layer 3: block-diagonal -> [mu (out) | std_raw (out) | value (1)]
    y = jnp.dot(h.astype(cdt), w3_ref[...],
                preferred_element_type=jnp.float32) + b3

    # softplus(+1e-5) only on the std columns, identity elsewhere (pure VPU/EUP,
    # no lane shuffling).  logaddexp(x, 0) == numerically-stable softplus.
    col = jax.lax.broadcasted_iota(jnp.int32, y.shape, 1)
    is_std = jnp.logical_and(col >= out_dim, col < 2 * out_dim)
    out_ref[...] = jnp.where(is_std, jnp.logaddexp(y, 0.0) + 1e-5, y)


# --------------------------------------------------------------------------
# Wrapper
# --------------------------------------------------------------------------
def mlp_actor_critic_forward(state, packed, *, block_b=256):
    """Full actor+critic forward in one Pallas kernel.

    state : [B, input_dim] float32
    packed: dict from pack_params() (bf16 fused weights + f32 bias slab)
    Returns (mu [B, out], std [B, out], value [B, 1]) in float32.
    """
    B, D = state.shape
    h2 = packed["w1"].shape[1]
    ow = packed["w3"].shape[1]
    out_dim = (ow - 1) // 2

    # batch tiling (grid is trivially (1,) at small B)
    tb = min(block_b, B)
    nb = pl.cdiv(B, tb)
    bp = nb * tb

    x = state.astype(packed["w1"].dtype)
    if bp != B:
        x = jnp.pad(x, ((0, bp - B), (0, 0)))

    kernel = functools.partial(_actor_critic_kernel, out_dim=out_dim)

    out = pl.pallas_call(
        kernel,
        out_shape=jax.ShapeDtypeStruct((bp, ow), jnp.float32),
        grid=(nb,),
        in_specs=[
            pl.BlockSpec((tb, D), lambda i: (i, 0)),                  # state tile
            pl.BlockSpec((D, h2), lambda i: (0, 0)),                  # W1 (resident)
            pl.BlockSpec((h2, h2), lambda i: (0, 0)),                 # W2 (resident)
            pl.BlockSpec((h2, ow), lambda i: (0, 0)),                 # W3 (resident)
            pl.BlockSpec(packed["b"].shape, lambda i: (0, 0)),        # bias slab
        ],
        out_specs=pl.BlockSpec((tb, ow), lambda i: (i, 0)),           # [mu|std|value]
        compiler_params=pltpu.CompilerParams(
            dimension_semantics=("parallel",)),
    )(x, packed["w1"], packed["w2"], packed["w3"], packed["b"])

    out = out[:B]
    mu = out[:, :out_dim]
    std = out[:, out_dim:2 * out_dim]
    value = out[:, 2 * out_dim:]
    return mu, std, value


# --------------------------------------------------------------------------
# Parameter init / packing (mimics PyTorch nn.Linear defaults)
# --------------------------------------------------------------------------
def init_raw_params(key, input_dim, hidden_dim, output_dim):
    """Unfused f32 parameters, weights stored as [in, out] (y = x @ W + b)."""
    def linear(k, fan_in, fan_out):
        kw, kb = jax.random.split(k)
        bound = 1.0 / jnp.sqrt(float(fan_in))
        w = jax.random.uniform(kw, (fan_in, fan_out), jnp.float32, -bound, bound)
        b = jax.random.uniform(kb, (fan_out,), jnp.float32, -bound, bound)
        return w, b

    keys = jax.random.split(key, 6)
    aw1, ab1 = linear(keys[0], input_dim, hidden_dim)
    aw2, ab2 = linear(keys[1], hidden_dim, hidden_dim)
    aw3, ab3 = linear(keys[2], hidden_dim, 2 * output_dim)
    cw1, cb1 = linear(keys[3], input_dim, hidden_dim)
    cw2, cb2 = linear(keys[4], hidden_dim, hidden_dim)
    cw3, cb3 = linear(keys[5], hidden_dim, 1)
    return dict(aw1=aw1, ab1=ab1, aw2=aw2, ab2=ab2, aw3=aw3, ab3=ab3,
                cw1=cw1, cb1=cb1, cw2=cw2, cb2=cb2, cw3=cw3, cb3=cb3)


def pack_params(raw, compute_dtype=jnp.bfloat16):
    """Fuse actor/critic params into 3 bf16 weight slabs + 1 f32 bias slab."""
    D, H = raw["aw1"].shape
    out2 = raw["aw3"].shape[1]        # 2*output_dim
    ow = out2 + 1                     # mu | std | value
    h2 = 2 * H
    W = max(h2, ow)

    # layer 1: shared input -> concatenated hidden [actor | critic]
    w1 = jnp.concatenate([raw["aw1"], raw["cw1"]], axis=1)            # [D, 2H]

    # layer 2: block diagonal
    w2 = jnp.zeros((h2, h2), jnp.float32)
    w2 = w2.at[:H, :H].set(raw["aw2"])
    w2 = w2.at[H:, H:].set(raw["cw2"])

    # layer 3: block diagonal -> [mu|std (actor), value (critic)]
    w3 = jnp.zeros((h2, ow), jnp.float32)
    w3 = w3.at[:H, :out2].set(raw["aw3"])
    w3 = w3.at[H:, out2:].set(raw["cw3"])

    def row(v):
        v = v.reshape(1, -1)
        return jnp.pad(v, ((0, 0), (0, W - v.shape[1])))

    b = jnp.concatenate([
        row(jnp.concatenate([raw["ab1"], raw["cb1"]])),
        row(jnp.concatenate([raw["ab2"], raw["cb2"]])),
        row(jnp.concatenate([raw["ab3"], raw["cb3"]])),
    ], axis=0).astype(jnp.float32)                                    # [3, W]

    return {
        "w1": w1.astype(compute_dtype),
        "w2": w2.astype(compute_dtype),
        "w3": w3.astype(compute_dtype),
        "b": b,
    }


# --------------------------------------------------------------------------
# Pure-JAX reference (unfused, mirrors the PyTorch module; same bf16-in /
# f32-accumulate numerics as the kernel)
# --------------------------------------------------------------------------
def reference_forward(state, raw, compute_dtype=jnp.bfloat16):
    def lin(x, w, b):
        return jnp.dot(x.astype(compute_dtype), w.astype(compute_dtype),
                       preferred_element_type=jnp.float32) + b

    def mlp(x, w1, b1, w2, b2, w3, b3):
        h = jnp.maximum(lin(x, w1, b1), 0.0)
        h = jnp.maximum(lin(h, w2, b2), 0.0)
        return lin(h, w3, b3)

    value = mlp(state, raw["cw1"], raw["cb1"], raw["cw2"], raw["cb2"],
                raw["cw3"], raw["cb3"])
    mu_std = mlp(state, raw["aw1"], raw["ab1"], raw["aw2"], raw["ab2"],
                 raw["aw3"], raw["ab3"])
    out_dim = mu_std.shape[-1] // 2
    mu, std_raw = mu_std[:, :out_dim], mu_std[:, out_dim:]
    std = jax.nn.softplus(std_raw) + 1e-5
    return mu, std, value


if __name__ == "__main__":
    input_dim, hidden_dim, output_dim = 16, 32, 4
    batch = 8

    key = jax.random.PRNGKey(0)
    k_state, k_params = jax.random.split(key)
    state = jax.random.normal(k_state, (batch, input_dim), dtype=jnp.float32)

    raw = init_raw_params(k_params, input_dim, hidden_dim, output_dim)
    packed = pack_params(raw)

    mu, std, value = jax.block_until_ready(
        mlp_actor_critic_forward(state, packed)
    )

    # check fused kernel against the unfused pure-JAX reference
    mu_r, std_r, value_r = reference_forward(state, raw)
    assert mu.shape == (batch, output_dim)
    assert std.shape == (batch, output_dim)
    assert value.shape == (batch, 1)
    assert jnp.allclose(mu, mu_r, atol=1e-4), float(jnp.max(jnp.abs(mu - mu_r)))
    assert jnp.allclose(std, std_r, atol=1e-4), float(jnp.max(jnp.abs(std - std_r)))
    assert jnp.allclose(value, value_r, atol=1e-4), float(jnp.max(jnp.abs(value - value_r)))
    assert bool(jnp.all(std > 0))

    print("KERNEL_OK")
</pallas_src>

<mosaic_0001>
module attributes {stable_mosaic.version = 11 : i64} {
  func.func @_actor_critic_kernel(%arg0: i32, %arg1: memref<8x16xbf16, #tpu.memory_space<vmem>>, %arg2: memref<16x64xbf16, #tpu.memory_space<vmem>>, %arg3: memref<64x64xbf16, #tpu.memory_space<vmem>>, %arg4: memref<64x9xbf16, #tpu.memory_space<vmem>>, %arg5: memref<3x64xf32, #tpu.memory_space<vmem>>, %arg6: memref<8x9xf32, #tpu.memory_space<vmem>>) attributes {dimension_semantics = [#tpu.dimension_semantics<parallel>], iteration_bounds = array<i64: 1>, scalar_prefetch = 0 : i64, scratch_operands = 0 : i64, tpu.core_type = #tpu.core_type<tc>, window_params = [{transform_indices = @transform_0, window_bounds = array<i64: 8, 16>}, {pipeline_mode = #tpu.pipeline_mode<synchronous>, transform_indices = @transform_1, window_bounds = array<i64: 16, 64>}, {pipeline_mode = #tpu.pipeline_mode<synchronous>, transform_indices = @transform_2, window_bounds = array<i64: 64, 64>}, {pipeline_mode = #tpu.pipeline_mode<synchronous>, transform_indices = @transform_3, window_bounds = array<i64: 64, 9>}, {pipeline_mode = #tpu.pipeline_mode<synchronous>, transform_indices = @transform_4, window_bounds = array<i64: 3, 64>}, {transform_indices = @transform_5, window_bounds = array<i64: 8, 9>}]} {
    %c0 = arith.constant 0 : index
    %c0_0 = arith.constant 0 : index
    %0 = vector.load %arg1[%c0, %c0_0] : memref<8x16xbf16, #tpu.memory_space<vmem>>, vector<8x16xbf16>
    %c0_1 = arith.constant 0 : index
    %c0_2 = arith.constant 0 : index
    %1 = vector.load %arg5[%c0_1, %c0_2] : memref<3x64xf32, #tpu.memory_space<vmem>>, vector<3x64xf32>
    %2 = vector.extract_strided_slice %1 {offsets = [0, 0], sizes = [1, 64], strides = [1, 1]} : vector<3x64xf32> to vector<1x64xf32>
    %3 = vector.extract_strided_slice %1 {offsets = [1, 0], sizes = [1, 64], strides = [1, 1]} : vector<3x64xf32> to vector<1x64xf32>
    %4 = vector.extract_strided_slice %1 {offsets = [2, 0], sizes = [1, 9], strides = [1, 1]} : vector<3x64xf32> to vector<1x9xf32>
    %c0_3 = arith.constant 0 : index
    %c0_4 = arith.constant 0 : index
    %5 = vector.load %arg2[%c0_3, %c0_4] : memref<16x64xbf16, #tpu.memory_space<vmem>>, vector<16x64xbf16>
    %cst = arith.constant dense<0.000000e+00> : vector<8x64xf32>
    %6 = tpu.matmul %0, %5, %cst {dimension_numbers = #tpu.dot_dimension_numbers<[1], [0], [0], [1], [0, 0, 1, 1], [], []>} : vector<8x16xbf16>, vector<16x64xbf16>, vector<8x64xf32> -> vector<8x64xf32>
    %7 = vector.broadcast %2 : vector<1x64xf32> to vector<8x64xf32>
    %8 = arith.addf %6, %7 : vector<8x64xf32>
    %cst_5 = arith.constant 0.000000e+00 : f32
    %9 = vector.broadcast %cst_5 : f32 to vector<8x64xf32>
    %10 = arith.maximumf %8, %9 : vector<8x64xf32>
    %11 = arith.truncf %10 : vector<8x64xf32> to vector<8x64xbf16>
    %c0_6 = arith.constant 0 : index
    %c0_7 = arith.constant 0 : index
    %12 = vector.load %arg3[%c0_6, %c0_7] : memref<64x64xbf16, #tpu.memory_space<vmem>>, vector<64x64xbf16>
    %cst_8 = arith.constant dense<0.000000e+00> : vector<8x64xf32>
    %13 = tpu.matmul %11, %12, %cst_8 {dimension_numbers = #tpu.dot_dimension_numbers<[1], [0], [0], [1], [0, 0, 1, 1], [], []>} : vector<8x64xbf16>, vector<64x64xbf16>, vector<8x64xf32> -> vector<8x64xf32>
    %14 = vector.broadcast %3 : vector<1x64xf32> to vector<8x64xf32>
    %15 = arith.addf %13, %14 : vector<8x64xf32>
    %cst_9 = arith.constant 0.000000e+00 : f32
    %16 = vector.broadcast %cst_9 : f32 to vector<8x64xf32>
    %17 = arith.maximumf %15, %16 : vector<8x64xf32>
    %18 = arith.truncf %17 : vector<8x64xf32> to vector<8x64xbf16>
    %c0_10 = arith.constant 0 : index
    %c0_11 = arith.constant 0 : index
    %19 = vector.load %arg4[%c0_10, %c0_11] : memref<64x9xbf16, #tpu.memory_space<vmem>>, vector<64x9xbf16>
    %cst_12 = arith.constant dense<0.000000e+00> : vector<8x9xf32>
    %20 = tpu.matmul %18, %19, %cst_12 {dimension_numbers = #tpu.dot_dimension_numbers<[1], [0], [0], [1], [0, 0, 1, 1], [], []>} : vector<8x64xbf16>, vector<64x9xbf16>, vector<8x9xf32> -> vector<8x9xf32>
    %21 = vector.broadcast %4 : vector<1x9xf32> to vector<8x9xf32>
    %22 = arith.addf %20, %21 : vector<8x9xf32>
    %23 = tpu.iota {dimensions = array<i32: 1>} : vector<8x9xi32>
    %c4_i32 = arith.constant 4 : i32
    %24 = vector.broadcast %c4_i32 : i32 to vector<8x9xi32>
    %25 = arith.cmpi sge, %23, %24 : vector<8x9xi32>
    %c8_i32 = arith.constant 8 : i32
    %26 = vector.broadcast %c8_i32 : i32 to vector<8x9xi32>
    %27 = arith.cmpi slt, %23, %26 : vector<8x9xi32>
    %28 = arith.andi %25, %27 : vector<8x9xi1>
    %cst_13 = arith.constant 0.000000e+00 : f32
    %29 = vector.broadcast %cst_13 : f32 to vector<8x9xf32>
    %30 = arith.maximumf %22, %29 : vector<8x9xf32>
    %31 = vector.broadcast %cst_13 : f32 to vector<8x9xf32>
    %32 = arith.subf %22, %31 : vector<8x9xf32>
    %33 = arith.cmpf one, %32, %32 : vector<8x9xf32>
    %34 = vector.broadcast %cst_13 : f32 to vector<8x9xf32>
    %35 = arith.addf %22, %34 : vector<8x9xf32>
    %36 = math.absf %32 : vector<8x9xf32>
    %cst_14 = arith.constant 0.000000e+00 : f32
    %37 = vector.broadcast %cst_14 : f32 to vector<8x9xf32>
    %38 = arith.subf %37, %36 : vector<8x9xf32>
    %39 = math.exp %38 : vector<8x9xf32>
    %40 = math.log1p %39 : vector<8x9xf32>
    %41 = arith.addf %30, %40 : vector<8x9xf32>
    %42 = arith.select %33, %35, %41 : vector<8x9xi1>, vector<8x9xf32>
    %cst_15 = arith.constant 9.99999974E-6 : f32
    %43 = vector.broadcast %cst_15 : f32 to vector<8x9xf32>
    %44 = arith.addf %42, %43 : vector<8x9xf32>
    %45 = arith.select %28, %44, %22 : vector<8x9xi1>, vector<8x9xf32>
    %c0_16 = arith.constant 0 : index
    %c0_17 = arith.constant 0 : index
    %46 = vector.load %arg6[%c0_16, %c0_17] : memref<8x9xf32, #tpu.memory_space<vmem>>, vector<8x9xf32>
    tpu.vector_store %arg6[%c0_16, %c0_17], %45 {strides = array<i32>} : memref<8x9xf32, #tpu.memory_space<vmem>>, vector<8x9xf32>,
    return
  }
  func.func @transform_0(%arg0: i32) -> (i32, i32) {
    %c0_i32 = arith.constant 0 : i32
    %c0_i32_0 = arith.constant 0 : i32
    return %arg0, %c0_i32 : i32, i32
  }
  func.func @transform_1(%arg0: i32) -> (i32, i32) {
    %c0_i32 = arith.constant 0 : i32
    %c0_i32_0 = arith.constant 0 : i32
    %c0_i32_1 = arith.constant 0 : i32
    return %c0_i32, %c0_i32_0 : i32, i32
  }
  func.func @transform_2(%arg0: i32) -> (i32, i32) {
    %c0_i32 = arith.constant 0 : i32
    %c0_i32_0 = arith.constant 0 : i32
    %c0_i32_1 = arith.constant 0 : i32
    return %c0_i32, %c0_i32_0 : i32, i32
  }
  func.func @transform_3(%arg0: i32) -> (i32, i32) {
    %c0_i32 = arith.constant 0 : i32
    %c0_i32_0 = arith.constant 0 : i32
    %c0_i32_1 = arith.constant 0 : i32
    return %c0_i32, %c0_i32_0 : i32, i32
  }
  func.func @transform_4(%arg0: i32) -> (i32, i32) {
    %c0_i32 = arith.constant 0 : i32
    %c0_i32_0 = arith.constant 0 : i32
    %c0_i32_1 = arith.constant 0 : i32
    return %c0_i32, %c0_i32_0 : i32, i32
  }
  func.func @transform_5(%arg0: i32) -> (i32, i32) {
    %c0_i32 = arith.constant 0 : i32
    %c0_i32_0 = arith.constant 0 : i32
    return %arg0, %c0_i32 : i32, i32
  }
}

</mosaic_0001>

<llo_original>
// kernel: tpu_custom_call.1
$region0: #{tpu_custom_call.1}
  #allocation0 [shape = 'u32[]', space=smem, size = 0x4, offset = 0x4, fixed_abs, tag = 'smem constant byte address 0x4 - core index']
  #allocation1 [shape = 'u32[144,128]{1,0:T(1,128)}', space=vmem, size = 0x12000, scoped, tag = 'internal scratch']
  %s0 = inlined_call_operand.hbm [shape: bf16[8,16], index: 0, kind: input, shape index: {}]
  %s1 = inlined_call_operand.vmem [shape: bf16[16,64], index: 1, kind: input, shape index: {}]
  %s2 = inlined_call_operand.vmem [shape: bf16[64,64], index: 2, kind: input, shape index: {}]
  %s3 = inlined_call_operand.vmem [shape: bf16[64,9], index: 3, kind: input, shape index: {}]
  %s4 = inlined_call_operand.vmem [shape: f32[3,64], index: 4, kind: input, shape index: {}]
  %s5 = inlined_call_operand.hbm [shape: f32[8,9], index: 5, kind: output, shape index: {}]
  %s6 = sld [smem:[#allocation0]]
  $region34: #{tpu_custom_call.1} parent=0
    _
  %s8 = ssub.s32 1, %s6
  %s9 = scalar_select 0, %s8, %s6
  $region1: #{tpu_custom_call.1} parent=0
    #allocation2 [shape = 'u8[2048]{0}', space=vmem, size = 0x800, scoped, tag = 'input window, operand 0, single buffered']
    #allocation3 [shape = 's32[1]{0}', space=sflag, size = 0x4, scoped, tag = 'scoped memory for tpu_custom_call.1']
    #allocation4 [shape = 's32[1]{0}', space=sflag, size = 0x4, scoped, tag = 'scoped memory for tpu_custom_call.1']
    #allocation5 [shape = 'u8[4096]{0}', space=vmem, size = 0x1000, scoped, tag = 'output window, operand 0, single buffered']
    %10 = vsyncpa [#allocation3], 0
    %11 = vsyncpa [#allocation4], 0
    // Predicated region
    $region2: #{tpu_custom_call.1} parent=1 // pred_check
      _
    $region3: #{tpu_custom_call.1} parent=1 // pred_check_branch
      %13 = sbr.rel (0) target = $region5
    $region4: #{tpu_custom_call.1} parent=1 // pred_region
      %s15 = ssub.s32 64, 64
      %16 = vsyncadd [#allocation3], %s15
      %s18 = sshll.u32 [#allocation2], 4
      %s19 = int_to_ptr.vmem [resolvable:$true] %s18
      %21 = dma.hbm_to_vmem [thread:$0]  %s0, 64, %s19, [#allocation3]
    $region5: #{tpu_custom_call.1} parent=1 // pred_fallthru
      _
    // Predicated region
    $region6: #{tpu_custom_call.1} parent=1 // pred_check
      _
    $region7: #{tpu_custom_call.1} parent=1 // pred_check_branch
      %23 = sbr.rel (0) target = $region9
    $region8: #{tpu_custom_call.1} parent=1 // pred_region
      _
    $region9: #{tpu_custom_call.1} parent=1 // pred_fallthru
      _
    // Predicated region
    $region10: #{tpu_custom_call.1} parent=1 // pred_check
      _
    $region11: #{tpu_custom_call.1} parent=1 // pred_check_branch
      %25 = sbr.rel (0) target = $region13
    $region12: #{tpu_custom_call.1} parent=1 // pred_region
      _
    $region13: #{tpu_custom_call.1} parent=1 // pred_fallthru
      _
    // Predicated region
    $region14: #{tpu_custom_call.1} parent=1 // pred_check
      _
    $region15: #{tpu_custom_call.1} parent=1 // pred_check_branch
      %27 = sbr.rel (0) target = $region17
    $region16: #{tpu_custom_call.1} parent=1 // pred_region
      _
    $region17: #{tpu_custom_call.1} parent=1 // pred_fallthru
      _
    // Predicated region
    $region18: #{tpu_custom_call.1} parent=1 // pred_check
      _
    $region19: #{tpu_custom_call.1} parent=1 // pred_check_branch
      %29 = sbr.rel (0) target = $region21
    $region20: #{tpu_custom_call.1} parent=1 // pred_region
      _
    $region21: #{tpu_custom_call.1} parent=1 // pred_fallthru
      _
    // Predicated region
    $region22: #{tpu_custom_call.1} parent=1 // pred_check
      _
    $region23: #{tpu_custom_call.1} parent=1 // pred_check_branch
      %31 = sbr.rel (0) target = $region25
    $region24: #{tpu_custom_call.1} parent=1 // pred_region
      %32 = dma.done [#allocation3], 64
    $region25: #{tpu_custom_call.1} parent=1 // pred_fallthru
      _
    %v34 = vld [vmem:[#allocation2] sm:$0xf]
    %v35 = vld [vmem:[%s4] sm:$0x7]
    %v36 = vld [vmem:[%s1] sm:$0xf]
    %v37 = vld [vmem:[%s1 + $0x4] sm:$0xf]
    %v38 = vlaneseq
    %v39 = vshrl.u32 %v38, 7
    %v40 = vsub.s32 0, %v39
    %v41 = vrot.slane %v35, %v40
    %v44 = vunpack.c.l.b16 %v36
    %v45 = vunpack.c.l.b16 %v37
    %v46 = vpack.c.b16 %v45, %v44
    %vm48 = vcmask 130048
    %v50 = vsel %vm48, %v34, 0
    %52 = vmatprep.subr.bf16.mxu0 0
    %53 = vmatpush1.bf16.msra.mxu0 %v46
    %54 = vmatprep.subr.bf16.mxu0 0
    %55 = vmatpush1.bf16.msra.mxu0 0
    %56 = vmatprep.subr.bf16.mxu0 0
    %57 = vmatpush1.bf16.msra.mxu0 0
    %58 = vmatprep.subr.bf16.mxu0 0
    %59 = vmatpush1.bf16.msra.mxu0 0
    %60 = vmatprep.subr.bf16.mxu0 0
    %61 = vmatpush1.bf16.msra.mxu0 0
    %62 = vmatprep.subr.bf16.mxu0 0
    %63 = vmatpush1.bf16.msra.mxu0 0
    %64 = vmatprep.subr.bf16.mxu0 0
    %65 = vmatpush1.bf16.msra.mxu0 0
    %66 = vmatprep.subr.bf16.mxu0 0
    %67 = vmatpush1.bf16.msra.mxu0 0
    %68 = vmatprep.subr.bf16.mxu0 0
    %69 = vmatpush1.bf16.msra.mxu0 0
    %70 = vmatprep.subr.bf16.mxu0 0
    %71 = vmatpush1.bf16.msra.mxu0 0
    %72 = vmatprep.subr.bf16.mxu0 0
    %73 = vmatpush1.bf16.msra.mxu0 0
    %74 = vmatprep.subr.bf16.mxu0 0
    %75 = vmatpush1.bf16.msra.mxu0 0
    %76 = vmatprep.subr.bf16.mxu0 0
    %77 = vmatpush1.bf16.msra.mxu0 0
    %78 = vmatprep.subr.bf16.mxu0 0
    %79 = vmatpush1.bf16.msra.mxu0 0
    %80 = vmatprep.subr.bf16.mxu0 0
    %81 = vmatpush1.bf16.msra.mxu0 0
    %82 = vmatprep.subr.bf16.mxu0 0
    %83 = vmatpush1.bf16.msra.mxu0 0
    %84 = vmatprep.mubr.bf16.mxu0 0
    %85 = vmatmul.mubr.bf16.gmra.mrb[0].mxu0 %v50
    %v86 = vpop.f32.mrb[0].mxu0
    %v87 = vadd.f32 %v41, %v86
    %v88 = vpop.f32.mrb[0].mxu0
    %v89 = vpop.f32.mrb[0].mxu0
    %v90 = vpop.f32.mrb[0].mxu0
    %91 = vdwg.mxu0
    %v92 = vmax.f32 %v87, 0.0
    %v93 = vpack.c.bf16 %v92, %v92
    %v94 = vld [vmem:[%s2] sm:$0xf]
    %v95 = vld [vmem:[%s2 + $0x4] sm:$0xf]
    %v96 = vld [vmem:[%s2 + $0x8] sm:$0xf]
    %v97 = vld [vmem:[%s2 + $0xc] sm:$0xf]
    %v98 = vld [vmem:[%s2 + $0x10] sm:$0xf]
    %v99 = vld [vmem:[%s2 + $0x14] sm:$0xf]
    %v100 = vld [vmem:[%s2 + $0x18] sm:$0xf]
    %v101 = vld [vmem:[%s2 + $0x1c] sm:$0xf]
    %v102 = vlaneseq
    %v103 = vshrl.u32 %v102, 7
    %v104 = vsub.s32 1, %v103
    %v105 = vrot.slane %v35, %v104
    %v114 = vunpack.c.l.b16 %v94
    %v115 = vunpack.c.l.b16 %v95
    %v116 = vunpack.c.l.b16 %v96
    %v117 = vunpack.c.l.b16 %v97
    %v118 = vunpack.c.l.b16 %v98
    %v119 = vunpack.c.l.b16 %v99
    %v120 = vunpack.c.l.b16 %v100
    %v121 = vunpack.c.l.b16 %v101
    %v122 = vpack.c.b16 %v115, %v114
    %v123 = vpack.c.b16 %v117, %v116
    %v124 = vpack.c.b16 %v119, %v118
    %v125 = vpack.c.b16 %v121, %v120
    %vm130 = vcmask 523264
    %v132 = vsel %vm130, %v93, 0
    %134 = vmatprep.subr.bf16.mxu0 0
    %135 = vmatpush1.bf16.msra.mxu0 %v122
    %136 = vmatprep.subr.bf16.mxu0 0
    %137 = vmatpush1.bf16.msra.mxu0 %v123
    %138 = vmatprep.subr.bf16.mxu0 0
    %139 = vmatpush1.bf16.msra.mxu0 %v124
    %140 = vmatprep.subr.bf16.mxu0 0
    %141 = vmatpush1.bf16.msra.mxu0 %v125
    %142 = vmatprep.subr.bf16.mxu0 0
    %143 = vmatpush1.bf16.msra.mxu0 0
    %144 = vmatprep.subr.bf16.mxu0 0
    %145 = vmatpush1.bf16.msra.mxu0 0
    %146 = vmatprep.subr.bf16.mxu0 0
    %147 = vmatpush1.bf16.msra.mxu0 0
    %148 = vmatprep.subr.bf16.mxu0 0
    %149 = vmatpush1.bf16.msra.mxu0 0
    %150 = vmatprep.subr.bf16.mxu0 0
    %151 = vmatpush1.bf16.msra.mxu0 0
    %152 = vmatprep.subr.bf16.mxu0 0
    %153 = vmatpush1.bf16.msra.mxu0 0
    %154 = vmatprep.subr.bf16.mxu0 0
    %155 = vmatpush1.bf16.msra.mxu0 0
    %156 = vmatprep.subr.bf16.mxu0 0
    %157 = vmatpush1.bf16.msra.mxu0 0
    %158 = vmatprep.subr.bf16.mxu0 0
    %159 = vmatpush1.bf16.msra.mxu0 0
    %160 = vmatprep.subr.bf16.mxu0 0
    %161 = vmatpush1.bf16.msra.mxu0 0
    %162 = vmatprep.subr.bf16.mxu0 0
    %163 = vmatpush1.bf16.msra.mxu0 0
    %164 = vmatprep.subr.bf16.mxu0 0
    %165 = vmatpush1.bf16.msra.mxu0 0
    %166 = vmatprep.mubr.bf16.mxu0 0
    %167 = vmatmul.mubr.bf16.gmra.mrb[0].mxu0 %v132
    %v168 = vpop.f32.mrb[0].mxu0
    %v169 = vadd.f32 %v105, %v168
    %v170 = vpop.f32.mrb[0].mxu0
    %v171 = vpop.f32.mrb[0].mxu0
    %v172 = vpop.f32.mrb[0].mxu0
    %173 = vdwg.mxu0
    %v174 = vmax.f32 %v169, 0.0
    %v175 = vpack.c.bf16 %v174, %v174
    %v176 = vld [vmem:[%s3] sm:$0xf]
    %v177 = vld [vmem:[%s3 + $0x4] sm:$0xf]
    %v178 = vld [vmem:[%s3 + $0x8] sm:$0xf]
    %v179 = vld [vmem:[%s3 + $0xc] sm:$0xf]
    %v180 = vld [vmem:[%s3 + $0x10] sm:$0xf]
    %v181 = vld [vmem:[%s3 + $0x14] sm:$0xf]
    %v182 = vld [vmem:[%s3 + $0x18] sm:$0xf]
    %v183 = vld [vmem:[%s3 + $0x1c] sm:$0xf]
    %v184 = vlaneseq
    %v185 = vshrl.u32 %v184, 7
    %v186 = vsub.s32 2, %v185
    %v187 = vrot.slane %v35, %v186
    %v196 = vunpack.c.l.b16 %v176
    %v197 = vunpack.c.l.b16 %v177
    %v198 = vunpack.c.l.b16 %v178
    %v199 = vunpack.c.l.b16 %v179
    %v200 = vunpack.c.l.b16 %v180
    %v201 = vunpack.c.l.b16 %v181
    %v202 = vunpack.c.l.b16 %v182
    %v203 = vunpack.c.l.b16 %v183
    %v204 = vpack.c.b16 %v197, %v196
    %v205 = vpack.c.b16 %v199, %v198
    %v206 = vpack.c.b16 %v201, %v200
    %v207 = vpack.c.b16 %v203, %v202
    %v213 = vsel %vm130, %v175, 0
    %215 = vmatprep.subr.bf16.mxu0 0
    %216 = vmatpush1.bf16.msra.mxu0 %v204
    %217 = vmatprep.subr.bf16.mxu0 0
    %218 = vmatpush1.bf16.msra.mxu0 %v205
    %219 = vmatprep.subr.bf16.mxu0 0
    %220 = vmatpush1.bf16.msra.mxu0 %v206
    %221 = vmatprep.subr.bf16.mxu0 0
    %222 = vmatpush1.bf16.msra.mxu0 %v207
    %223 = vmatprep.subr.bf16.mxu0 0
    %224 = vmatpush1.bf16.msra.mxu0 0
    %225 = vmatprep.subr.bf16.mxu0 0
    %226 = vmatpush1.bf16.msra.mxu0 0
    %227 = vmatprep.subr.bf16.mxu0 0
    %228 = vmatpush1.bf16.msra.mxu0 0
    %229 = vmatprep.subr.bf16.mxu0 0
    %230 = vmatpush1.bf16.msra.mxu0 0
    %231 = vmatprep.subr.bf16.mxu0 0
    %232 = vmatpush1.bf16.msra.mxu0 0
    %233 = vmatprep.subr.bf16.mxu0 0
    %234 = vmatpush1.bf16.msra.mxu0 0
    %235 = vmatprep.subr.bf16.mxu0 0
    %236 = vmatpush1.bf16.msra.mxu0 0
    %237 = vmatprep.subr.bf16.mxu0 0
    %238 = vmatpush1.bf16.msra.mxu0 0
    %239 = vmatprep.subr.bf16.mxu0 0
    %240 = vmatpush1.bf16.msra.mxu0 0
    %241 = vmatprep.subr.bf16.mxu0 0
    %242 = vmatpush1.bf16.msra.mxu0 0
    %243 = vmatprep.subr.bf16.mxu0 0
    %244 = vmatpush1.bf16.msra.mxu0 0
    %245 = vmatprep.subr.bf16.mxu0 0
    %246 = vmatpush1.bf16.msra.mxu0 0
    %247 = vmatprep.mubr.bf16.mxu0 0
    %248 = vmatmul.mubr.bf16.gmra.mrb[0].mxu0 %v213
    %v249 = vpop.f32.mrb[0].mxu0
    %v250 = vadd.f32 %v187, %v249
    %v251 = vpop.f32.mrb[0].mxu0
    %v252 = vpop.f32.mrb[0].mxu0
    %v253 = vpop.f32.mrb[0].mxu0
    %254 = vdwg.mxu0
    %v255 = vlaneseq
    %v256 = vand.u32 %v255, 127
    %vm257 = vcmp.ge.s32.totalorder %v256, 4
    %vm258 = vcmp.lt.s32.totalorder %v256, 8
    %vm259 = vmand %vm257, %vm258
    %v260 = vmax.f32 %v250, 0.0
    %vm261 = vcmp.ne.f32.partialorder %v250, %v250
    %v262 = vadd.f32 %v250, 0.0
    %v263 = vand.u32 2147483647, %v250
    %v264 = vsub.f32 0.0, %v263
    %v265 = vmul.f32 %v264, 1.442695
    %v266 = vpow.pop %v265
    %v267 = vadd.f32 %v266, 1.0
    %v268 = vlog2.pop %v267
    %v269 = vmul.f32 %v268, 0.6931472
    %v270 = vmul.f32 -0.5, %v266
    %v271 = vadd.f32 %v270, 1.0
    %v272 = vmul.f32 %v271, %v266
    %v273 = vand.u32 2147483647, %v266
    %vm274 = vcmp.lt.f32.partialorder %v273, 0.0004427343
    %v275 = vsel %vm274, %v272, %v269
    %v276 = vadd.f32 %v260, %v275
    %v277 = vsel %vm261, %v262, %v276
    %v278 = vadd.f32 %v277, 1e-05
    %v279 = vsel %vm259, %v278, %v250
    %vm280 = vcmask 72704
    %281 = vst.msk [vmem:[#allocation5] sm:$0xff] %vm280, %v279
    // Predicated region
    $region26: #{tpu_custom_call.1} parent=1 // pred_check
      _
    $region27: #{tpu_custom_call.1} parent=1 // pred_check_branch
      %283 = sbr.rel (0) target = $region29
    $region28: #{tpu_custom_call.1} parent=1 // pred_region
      %s285 = ssub.s32 128, 128
      %286 = vsyncadd [#allocation4], %s285
      %s288 = sshll.u32 [#allocation5], 4
      %s289 = int_to_ptr.vmem [resolvable:$true] %s288
      %291 = dma.vmem_to_hbm [thread:$0]  %s289, 128, %s5, [#allocation4]
    $region29: #{tpu_custom_call.1} parent=1 // pred_fallthru
      _
    // Predicated region
    $region30: #{tpu_custom_call.1} parent=1 // pred_check
      _
    $region31: #{tpu_custom_call.1} parent=1 // pred_check_branch
      %293 = sbr.rel (0) target = $region33
    $region32: #{tpu_custom_call.1} parent=1 // pred_region
      %294 = dma.done [#allocation4], 128
    $region33: #{tpu_custom_call.1} parent=1 // pred_fallthru
      _
    %295 = vsyncpa [#allocation3], 1
    %296 = vsyncpa [#allocation4], 1

</llo_original>
